<compile_context>
chip_gen: v7x
topology: tpu7x:2x2x1
jax: 0.10.0
libtpu: 0.0.40
codegen_flags: <defaults>
</compile_context>

<pallas_src>
import jax
import jax.numpy as jnp
import numpy as np
from jax.experimental import pallas as pl
from jax.experimental.pallas import tpu as pltpu


def _spatial_loss_kernel(tgt_ref, logits_ref, coords_ref, out_ref):
    logits = logits_ref[...]                                    # (B, C) f32
    coords = coords_ref[...]                                    # (C, K) f32
    B = logits.shape[0]

    # Un-normalized softmax weights (row denominators applied at the end).
    m = jnp.max(logits, axis=1, keepdims=True)                  # (B, 1)
    e = jnp.exp(logits - m)                                     # (B, C)  EUP
    denom = jnp.sum(e, axis=1, keepdims=True)                   # (B, 1)

    # Per-class squared norms.
    c_norm = jnp.sum(coords * coords, axis=1, keepdims=True)    # (C, 1)

    # Gather target coordinates from VMEM-resident coords using the
    # scalar-prefetched (SMEM) target indices: tiny unrolled loop over B.
    tgt = jnp.concatenate(
        [coords_ref[pl.ds(tgt_ref[b], 1), :] for b in range(B)], axis=0)  # (B, K)

    # MXU contractions over C (no coords transpose, no (B, C) intermediate).
    ec = jnp.dot(e, coords, preferred_element_type=jnp.float32)    # (B, K)
    ecn = jnp.dot(e, c_norm, preferred_element_type=jnp.float32)   # (B, 1)

    t_norm = jnp.sum(tgt * tgt, axis=1, keepdims=True)          # (B, 1)
    cross = jnp.sum(ec * tgt, axis=1, keepdims=True)            # (B, 1)

    per_row = (ecn - 2.0 * cross) / denom + t_norm              # (B, 1)
    out_ref[0, 0] = jnp.sum(per_row)


def spatial_loss(raw_logits, coordinates, target):
    """raw_logits: (B, C), coordinates: (C, K), target: (B,) int -> scalar f32."""
    B, C = raw_logits.shape
    K = coordinates.shape[1]

    cost = pl.CostEstimate(
        flops=2 * B * C * K + 2 * B * C + 8 * B * C + 6 * B * K,
        transcendentals=B * C,
        bytes_accessed=4 * (B * C + C * K + B + 1),
    )

    out = pl.pallas_call(
        _spatial_loss_kernel,
        out_shape=jax.ShapeDtypeStruct((1, 1), jnp.float32),
        grid_spec=pltpu.PrefetchScalarGridSpec(
            num_scalar_prefetch=1,
            grid=(1,),
            in_specs=[
                pl.BlockSpec((B, C), lambda i, tgt: (0, 0)),
                pl.BlockSpec((C, K), lambda i, tgt: (0, 0)),
            ],
            out_specs=pl.BlockSpec(memory_space=pltpu.SMEM),
        ),
        compiler_params=pltpu.CompilerParams(
            dimension_semantics=("arbitrary",)),
        cost_estimate=cost,
    )(target.astype(jnp.int32),
      raw_logits.astype(jnp.float32),
      coordinates.astype(jnp.float32))
    return out[0, 0]


def _reference(raw_logits, coordinates, target):
    sm = jax.nn.softmax(raw_logits, axis=1)
    tgt = coordinates[target]                                   # (B, K)
    dists = coordinates[:, None, :] - tgt[None, :, :]           # (C, B, K)
    l2_sq = jnp.sum(dists ** 2, axis=2).T                       # (B, C)
    return jnp.sum(sm * l2_sq)


if __name__ == "__main__":
    key = jax.random.PRNGKey(0)
    k1, k2, k3 = jax.random.split(key, 3)

    B, C, K = 8, 16, 8   # batch, num_classes, num_coords
    raw_logits = jax.random.normal(k1, (B, C), dtype=jnp.float32)
    coordinates = jax.random.normal(k2, (C, K), dtype=jnp.float32)
    target = jax.random.randint(k3, (B,), 0, C, dtype=jnp.int32)

    loss = spatial_loss(raw_logits, coordinates, target)
    loss = jax.block_until_ready(loss)

    ref = _reference(raw_logits, coordinates, target)
    np.testing.assert_allclose(np.asarray(loss), np.asarray(ref), rtol=1e-3, atol=1e-3)

    print("KERNEL_OK")
</pallas_src>

<mosaic_0001>
module attributes {stable_mosaic.version = 11 : i64} {
  func.func @_spatial_loss_kernel(%arg0: i32, %arg1: memref<8xi32, #tpu.memory_space<smem>>, %arg2: memref<8x16xf32, #tpu.memory_space<vmem>>, %arg3: memref<16x8xf32, #tpu.memory_space<vmem>>, %arg4: memref<1x1xf32, #tpu.memory_space<smem>>) attributes {dimension_semantics = [#tpu.dimension_semantics<arbitrary>], iteration_bounds = array<i64: 1>, scalar_prefetch = 1 : i64, scratch_operands = 0 : i64, tpu.core_type = #tpu.core_type<tc>, window_params = [{pipeline_mode = #tpu.pipeline_mode<synchronous>, transform_indices = @transform_0, window_bounds = array<i64: 8, 16>}, {pipeline_mode = #tpu.pipeline_mode<synchronous>, transform_indices = @transform_1, window_bounds = array<i64: 16, 8>}, {transform_indices = @transform_2, window_bounds = array<i64: 1, 1>}]} {
    %c0 = arith.constant 0 : index
    %c0_0 = arith.constant 0 : index
    %0 = vector.load %arg2[%c0, %c0_0] : memref<8x16xf32, #tpu.memory_space<vmem>>, vector<8x16xf32>
    %c0_1 = arith.constant 0 : index
    %c0_2 = arith.constant 0 : index
    %1 = vector.load %arg3[%c0_1, %c0_2] : memref<16x8xf32, #tpu.memory_space<vmem>>, vector<16x8xf32>
    %cst = arith.constant dense<0xFF800000> : vector<8xf32>
    %2 = vector.multi_reduction <maximumf>, %0, %cst [1] : vector<8x16xf32> to vector<8xf32>
    %3 = vector.shape_cast %2 : vector<8xf32> to vector<8x1xf32>
    %4 = vector.broadcast %3 : vector<8x1xf32> to vector<8x16xf32>
    %5 = arith.subf %0, %4 : vector<8x16xf32>
    %6 = math.exp %5 : vector<8x16xf32>
    %cst_3 = arith.constant dense<0.000000e+00> : vector<8xf32>
    %7 = vector.multi_reduction <add>, %6, %cst_3 [1] : vector<8x16xf32> to vector<8xf32>
    %8 = vector.shape_cast %7 : vector<8xf32> to vector<8x1xf32>
    %9 = arith.mulf %1, %1 : vector<16x8xf32>
    %cst_4 = arith.constant dense<0.000000e+00> : vector<16xf32>
    %10 = vector.multi_reduction <add>, %9, %cst_4 [1] : vector<16x8xf32> to vector<16xf32>
    %11 = vector.shape_cast %10 : vector<16xf32> to vector<16x1xf32>
    %c0_5 = arith.constant 0 : index
    %12 = memref.load %arg1[%c0_5] : memref<8xi32, #tpu.memory_space<smem>>
    %13 = arith.index_cast %12 : i32 to index
    %c0_6 = arith.constant 0 : index
    %14 = vector.load %arg3[%13, %c0_6] : memref<16x8xf32, #tpu.memory_space<vmem>>, vector<1x8xf32>
    %c1 = arith.constant 1 : index
    %15 = memref.load %arg1[%c1] : memref<8xi32, #tpu.memory_space<smem>>
    %16 = arith.index_cast %15 : i32 to index
    %c0_7 = arith.constant 0 : index
    %17 = vector.load %arg3[%16, %c0_7] : memref<16x8xf32, #tpu.memory_space<vmem>>, vector<1x8xf32>
    %c2 = arith.constant 2 : index
    %18 = memref.load %arg1[%c2] : memref<8xi32, #tpu.memory_space<smem>>
    %19 = arith.index_cast %18 : i32 to index
    %c0_8 = arith.constant 0 : index
    %20 = vector.load %arg3[%19, %c0_8] : memref<16x8xf32, #tpu.memory_space<vmem>>, vector<1x8xf32>
    %c3 = arith.constant 3 : index
    %21 = memref.load %arg1[%c3] : memref<8xi32, #tpu.memory_space<smem>>
    %22 = arith.index_cast %21 : i32 to index
    %c0_9 = arith.constant 0 : index
    %23 = vector.load %arg3[%22, %c0_9] : memref<16x8xf32, #tpu.memory_space<vmem>>, vector<1x8xf32>
    %c4 = arith.constant 4 : index
    %24 = memref.load %arg1[%c4] : memref<8xi32, #tpu.memory_space<smem>>
    %25 = arith.index_cast %24 : i32 to index
    %c0_10 = arith.constant 0 : index
    %26 = vector.load %arg3[%25, %c0_10] : memref<16x8xf32, #tpu.memory_space<vmem>>, vector<1x8xf32>
    %c5 = arith.constant 5 : index
    %27 = memref.load %arg1[%c5] : memref<8xi32, #tpu.memory_space<smem>>
    %28 = arith.index_cast %27 : i32 to index
    %c0_11 = arith.constant 0 : index
    %29 = vector.load %arg3[%28, %c0_11] : memref<16x8xf32, #tpu.memory_space<vmem>>, vector<1x8xf32>
    %c6 = arith.constant 6 : index
    %30 = memref.load %arg1[%c6] : memref<8xi32, #tpu.memory_space<smem>>
    %31 = arith.index_cast %30 : i32 to index
    %c0_12 = arith.constant 0 : index
    %32 = vector.load %arg3[%31, %c0_12] : memref<16x8xf32, #tpu.memory_space<vmem>>, vector<1x8xf32>
    %c7 = arith.constant 7 : index
    %33 = memref.load %arg1[%c7] : memref<8xi32, #tpu.memory_space<smem>>
    %34 = arith.index_cast %33 : i32 to index
    %c0_13 = arith.constant 0 : index
    %35 = vector.load %arg3[%34, %c0_13] : memref<16x8xf32, #tpu.memory_space<vmem>>, vector<1x8xf32>
    %36 = tpu.concatenate %14, %17, %20, %23, %26, %29, %32, %35 in 0 : vector<1x8xf32>, vector<1x8xf32>, vector<1x8xf32>, vector<1x8xf32>, vector<1x8xf32>, vector<1x8xf32>, vector<1x8xf32>, vector<1x8xf32> -> vector<8x8xf32>
    %cst_14 = arith.constant dense<0.000000e+00> : vector<8x8xf32>
    %37 = tpu.matmul %6, %1, %cst_14 {dimension_numbers = #tpu.dot_dimension_numbers<[1], [0], [0], [1], [0, 0, 1, 1], [], []>} : vector<8x16xf32>, vector<16x8xf32>, vector<8x8xf32> -> vector<8x8xf32>
    %cst_15 = arith.constant dense<0.000000e+00> : vector<8x1xf32>
    %38 = tpu.matmul %6, %11, %cst_15 {dimension_numbers = #tpu.dot_dimension_numbers<[1], [0], [0], [1], [0, 0, 1, 1], [], []>} : vector<8x16xf32>, vector<16x1xf32>, vector<8x1xf32> -> vector<8x1xf32>
    %39 = arith.mulf %36, %36 : vector<8x8xf32>
    %cst_16 = arith.constant dense<0.000000e+00> : vector<8xf32>
    %40 = vector.multi_reduction <add>, %39, %cst_16 [1] : vector<8x8xf32> to vector<8xf32>
    %41 = vector.shape_cast %40 : vector<8xf32> to vector<8x1xf32>
    %42 = arith.mulf %37, %36 : vector<8x8xf32>
    %cst_17 = arith.constant dense<0.000000e+00> : vector<8xf32>
    %43 = vector.multi_reduction <add>, %42, %cst_17 [1] : vector<8x8xf32> to vector<8xf32>
    %44 = vector.shape_cast %43 : vector<8xf32> to vector<8x1xf32>
    %cst_18 = arith.constant 2.000000e+00 : f32
    %45 = vector.broadcast %cst_18 : f32 to vector<8x1xf32>
    %46 = arith.mulf %45, %44 : vector<8x1xf32>
    %47 = arith.subf %38, %46 : vector<8x1xf32>
    %48 = arith.divf %47, %8 : vector<8x1xf32>
    %49 = arith.addf %48, %41 : vector<8x1xf32>
    %50 = vector.shape_cast %49 : vector<8x1xf32> to vector<1x8x1xf32>
    %cst_19 = arith.constant dense<0.000000e+00> : vector<1xf32>
    %51 = vector.multi_reduction <add>, %50, %cst_19 [1, 2] : vector<1x8x1xf32> to vector<1xf32>
    %52 = vector.shape_cast %51 : vector<1xf32> to vector<1x1x1xf32>
    %53 = vector.extract %52[0, 0, 0] : f32 from vector<1x1x1xf32>
    %c0_20 = arith.constant 0 : index
    %c0_21 = arith.constant 0 : index
    %54 = memref.load %arg4[%c0_20, %c0_21] : memref<1x1xf32, #tpu.memory_space<smem>>
    memref.store %53, %arg4[%c0_20, %c0_21] : memref<1x1xf32, #tpu.memory_space<smem>>
    return
  }
  func.func @transform_0(%arg0: i32, %arg1: memref<8xi32, #tpu.memory_space<smem>>) -> (i32, i32) {
    %c0_i32 = arith.constant 0 : i32
    %c0_i32_0 = arith.constant 0 : i32
    %c0_i32_1 = arith.constant 0 : i32
    return %c0_i32, %c0_i32_0 : i32, i32
  }
  func.func @transform_1(%arg0: i32, %arg1: memref<8xi32, #tpu.memory_space<smem>>) -> (i32, i32) {
    %c0_i32 = arith.constant 0 : i32
    %c0_i32_0 = arith.constant 0 : i32
    %c0_i32_1 = arith.constant 0 : i32
    return %c0_i32, %c0_i32_0 : i32, i32
  }
  func.func @transform_2(%arg0: i32, %arg1: memref<8xi32, #tpu.memory_space<smem>>) -> (i32, i32) {
    %c0_i32 = arith.constant 0 : i32
    %c0_i32_0 = arith.constant 0 : i32
    %c0_i32_1 = arith.constant 0 : i32
    return %c0_i32, %c0_i32_0 : i32, i32
  }
}

</mosaic_0001>

<llo_original>
// kernel: tpu_custom_call.1
$region0: #{tpu_custom_call.1}
  #allocation0 [shape = 'u32[]', space=smem, size = 0x4, offset = 0x4, fixed_abs, tag = 'smem constant byte address 0x4 - core index']
  #allocation1 [shape = 'u32[144,128]{1,0:T(1,128)}', space=vmem, size = 0x12000, scoped, tag = 'internal scratch']
  #allocation2 [shape = 's32[1]{0}', space=sflag, size = 0x4, scoped, tag = 'scoped memory for tpu_custom_call.1']
  #allocation3 [shape = 'u8[512]{0}', space=smem, size = 0x200, scoped, tag = 'prefetched SMEM operand 0']
  %s0 = inlined_call_operand.vmem [shape: s32[8], index: 0, kind: input, shape index: {}]
  %s1 = inlined_call_operand.vmem [shape: f32[8,16], index: 1, kind: input, shape index: {}]
  %s2 = inlined_call_operand.vmem [shape: f32[16,8], index: 2, kind: input, shape index: {}]
  %s3 = inlined_call_operand.hbm [shape: f32[1,1], index: 3, kind: output, shape index: {}]
  %s4 = sld [smem:[#allocation0]]
  $region18: #{tpu_custom_call.1} parent=0
    _
  %s6 = ssub.s32 1, %s4
  %s7 = scalar_select 0, %s6, %s4
  %s8 = sshll.u32 %s0, 4
  %s9 = int_to_ptr.vmem [resolvable:$true] %s8
  %11 = dma.vmem_to_smem %s9, 16, [#allocation3], [#allocation2]
  %12 = dma.done [#allocation2], 16
  %13 = sfence
  $region1: #{tpu_custom_call.1} parent=0
    #allocation4 [shape = 'u8[512]{0}', space=smem, size = 0x200, scoped, tag = 'output window, operand 0, single buffered']
    #allocation5 [shape = 's32[1]{0}', space=sflag, size = 0x4, scoped, tag = 'scoped memory for tpu_custom_call.1']
    %14 = vsyncpa [#allocation5], 0
    // Predicated region
    $region2: #{tpu_custom_call.1} parent=1 // pred_check
      _
    $region3: #{tpu_custom_call.1} parent=1 // pred_check_branch
      %16 = sbr.rel (0) target = $region5
    $region4: #{tpu_custom_call.1} parent=1 // pred_region
      _
    $region5: #{tpu_custom_call.1} parent=1 // pred_fallthru
      _
    // Predicated region
    $region6: #{tpu_custom_call.1} parent=1 // pred_check
      _
    $region7: #{tpu_custom_call.1} parent=1 // pred_check_branch
      %18 = sbr.rel (0) target = $region9
    $region8: #{tpu_custom_call.1} parent=1 // pred_region
      _
    $region9: #{tpu_custom_call.1} parent=1 // pred_fallthru
      _
    %v19 = vld [vmem:[%s1] sm:$0xff]
    %v20 = vld [vmem:[%s2] sm:$0xff]
    %v21 = vld [vmem:[%s2 + $0x8] sm:$0xff]
    %vm22 = vcmask 130048
    %v23 = vsel %vm22, %v19, -inf
    %24 = vmax.xlane.f32.xlu0 %v23
    %v25 = vpop.xlane.xlu0 %24
    %v26 = vsub.f32 %v19, %v25
    %v27 = vmul.f32 %v26, 1.442695
    %v28 = vpow.pop %v27
    %v29 = vsel %vm22, %v28, 0.0
    %30 = vadd.xlane.f32.xlu0 %v29
    %v31 = vpop.xlane.xlu0 %30
    %v32 = vmul.f32 %v20, %v20
    %v33 = vmul.f32 %v21, %v21
    %vm34 = vcmask 64512
    %v35 = vsel %vm34, %v32, 0.0
    %36 = vadd.xlane.f32.xlu0 %v35
    %v37 = vpop.xlane.xlu0 %36
    %v38 = vsel %vm34, %v33, 0.0
    %39 = vadd.xlane.f32.xlu0 %v38
    %v40 = vpop.xlane.xlu0 %39
    %s41 = sld [smem:[#allocation3]]
    %s42 = scalar_lea.vmem %s2, %s41
    %v43 = vld [vmem:[%s42] sm:$0x1]
    %s44 = sld [smem:[#allocation3 + $0x1]]
    %s45 = scalar_lea.vmem %s2, %s44
    %v46 = vld [vmem:[%s45] sm:$0x1]
    %s47 = sld [smem:[#allocation3 + $0x2]]
    %s48 = scalar_lea.vmem %s2, %s47
    %v49 = vld [vmem:[%s48] sm:$0x1]
    %s50 = sld [smem:[#allocation3 + $0x3]]
    %s51 = scalar_lea.vmem %s2, %s50
    %v52 = vld [vmem:[%s51] sm:$0x1]
    %s53 = sld [smem:[#allocation3 + $0x4]]
    %s54 = scalar_lea.vmem %s2, %s53
    %v55 = vld [vmem:[%s54] sm:$0x1]
    %s56 = sld [smem:[#allocation3 + $0x5]]
    %s57 = scalar_lea.vmem %s2, %s56
    %v58 = vld [vmem:[%s57] sm:$0x1]
    %s59 = sld [smem:[#allocation3 + $0x6]]
    %s60 = scalar_lea.vmem %s2, %s59
    %v61 = vld [vmem:[%s60] sm:$0x1]
    %s62 = sld [smem:[#allocation3 + $0x7]]
    %s63 = scalar_lea.vmem %s2, %s62
    %v64 = vld [vmem:[%s63] sm:$0x1]
    %v66 = vrot.slane %v46, 7
    %v69 = vrot.slane %v49, 6
    %v72 = vrot.slane %v52, 5
    %v75 = vrot.slane %v55, 4
    %v78 = vrot.slane %v58, 3
    %v81 = vrot.slane %v61, 2
    %v84 = vrot.slane %v64, 1
    %vm86 = vcmask 1040384
    %v87 = vsel %vm86, %v43, %v66
    %vm88 = vcmask 1041408
    %v89 = vsel %vm88, %v87, %v69
    %vm90 = vcmask 1042432
    %v91 = vsel %vm90, %v89, %v72
    %vm92 = vcmask 1043456
    %v93 = vsel %vm92, %v91, %v75
    %vm94 = vcmask 1044480
    %v95 = vsel %vm94, %v93, %v78
    %vm96 = vcmask 1045504
    %v97 = vsel %vm96, %v95, %v81
    %vm98 = vcmask 1046528
    %v99 = vsel %vm98, %v97, %v84
    %v101 = vsel %vm22, %v28, 0
    %103 = vmatprep.subr.mxu0 0.0
    %104 = vmatpush1.msra.mxu0 %v20
    %105 = vmatprep.subr.mxu0 0.0
    %106 = vmatpush1.msra.mxu0 %v21
    %107 = vmatprep.subr.mxu0 0.0
    %108 = vmatpush1.msra.mxu0 0.0
    %109 = vmatprep.subr.mxu0 0.0
    %110 = vmatpush1.msra.mxu0 0.0
    %111 = vmatprep.subr.mxu0 0.0
    %112 = vmatpush1.msra.mxu0 0.0
    %113 = vmatprep.subr.mxu0 0.0
    %114 = vmatpush1.msra.mxu0 0.0
    %115 = vmatprep.subr.mxu0 0.0
    %116 = vmatpush1.msra.mxu0 0.0
    %117 = vmatprep.subr.mxu0 0.0
    %118 = vmatpush1.msra.mxu0 0.0
    %119 = vmatprep.subr.mxu0 0.0
    %120 = vmatpush1.msra.mxu0 0.0
    %121 = vmatprep.subr.mxu0 0.0
    %122 = vmatpush1.msra.mxu0 0.0
    %123 = vmatprep.subr.mxu0 0.0
    %124 = vmatpush1.msra.mxu0 0.0
    %125 = vmatprep.subr.mxu0 0.0
    %126 = vmatpush1.msra.mxu0 0.0
    %127 = vmatprep.subr.mxu0 0.0
    %128 = vmatpush1.msra.mxu0 0.0
    %129 = vmatprep.subr.mxu0 0.0
    %130 = vmatpush1.msra.mxu0 0.0
    %131 = vmatprep.subr.mxu0 0.0
    %132 = vmatpush1.msra.mxu0 0.0
    %133 = vmatprep.subr.mxu0 0.0
    %134 = vmatpush1.msra.mxu0 0.0
    %135 = vmatprep.subr.mxu0 0.0
    %136 = vmatpush1.msra.mxu0 0.0
    %137 = vmatprep.subr.mxu0 0.0
    %138 = vmatpush1.msra.mxu0 0.0
    %139 = vmatprep.subr.mxu0 0.0
    %140 = vmatpush1.msra.mxu0 0.0
    %141 = vmatprep.subr.mxu0 0.0
    %142 = vmatpush1.msra.mxu0 0.0
    %143 = vmatprep.subr.mxu0 0.0
    %144 = vmatpush1.msra.mxu0 0.0
    %145 = vmatprep.subr.mxu0 0.0
    %146 = vmatpush1.msra.mxu0 0.0
    %147 = vmatprep.subr.mxu0 0.0
    %148 = vmatpush1.msra.mxu0 0.0
    %149 = vmatprep.subr.mxu0 0.0
    %150 = vmatpush1.msra.mxu0 0.0
    %151 = vmatprep.subr.mxu0 0.0
    %152 = vmatpush1.msra.mxu0 0.0
    %153 = vmatprep.subr.mxu0 0.0
    %154 = vmatpush1.msra.mxu0 0.0
    %155 = vmatprep.subr.mxu0 0.0
    %156 = vmatpush1.msra.mxu0 0.0
    %157 = vmatprep.subr.mxu0 0.0
    %158 = vmatpush1.msra.mxu0 0.0
    %159 = vmatprep.subr.mxu0 0.0
    %160 = vmatpush1.msra.mxu0 0.0
    %161 = vmatprep.subr.mxu0 0.0
    %162 = vmatpush1.msra.mxu0 0.0
    %163 = vmatprep.subr.mxu0 0.0
    %164 = vmatpush1.msra.mxu0 0.0
    %165 = vmatprep.subr.mxu0 0.0
    %166 = vmatpush1.msra.mxu0 0.0
    %167 = vmatprep.mubr.f32.mxu0 0.0
    %168 = vmatmul.mubr.f32.gmra.mrb[0].mxu0 %v101
    %v169 = vpop.f32.mrb[0].mxu0
    %v170 = vadd.f32 0.0, %v169
    %v171 = vpop.f32.mrb[0].mxu0
    %172 = vdwg.mxu0
    %173 = vmatprep.subr.mxu0 0.0
    %174 = vmatpush1.msra.mxu0 %v37
    %175 = vmatprep.subr.mxu0 0.0
    %176 = vmatpush1.msra.mxu0 %v40
    %177 = vmatprep.subr.mxu0 0.0
    %178 = vmatpush1.msra.mxu0 0.0
    %179 = vmatprep.subr.mxu0 0.0
    %180 = vmatpush1.msra.mxu0 0.0
    %181 = vmatprep.subr.mxu0 0.0
    %182 = vmatpush1.msra.mxu0 0.0
    %183 = vmatprep.subr.mxu0 0.0
    %184 = vmatpush1.msra.mxu0 0.0
    %185 = vmatprep.subr.mxu0 0.0
    %186 = vmatpush1.msra.mxu0 0.0
    %187 = vmatprep.subr.mxu0 0.0
    %188 = vmatpush1.msra.mxu0 0.0
    %189 = vmatprep.subr.mxu0 0.0
    %190 = vmatpush1.msra.mxu0 0.0
    %191 = vmatprep.subr.mxu0 0.0
    %192 = vmatpush1.msra.mxu0 0.0
    %193 = vmatprep.subr.mxu0 0.0
    %194 = vmatpush1.msra.mxu0 0.0
    %195 = vmatprep.subr.mxu0 0.0
    %196 = vmatpush1.msra.mxu0 0.0
    %197 = vmatprep.subr.mxu0 0.0
    %198 = vmatpush1.msra.mxu0 0.0
    %199 = vmatprep.subr.mxu0 0.0
    %200 = vmatpush1.msra.mxu0 0.0
    %201 = vmatprep.subr.mxu0 0.0
    %202 = vmatpush1.msra.mxu0 0.0
    %203 = vmatprep.subr.mxu0 0.0
    %204 = vmatpush1.msra.mxu0 0.0
    %205 = vmatprep.subr.mxu0 0.0
    %206 = vmatpush1.msra.mxu0 0.0
    %207 = vmatprep.subr.mxu0 0.0
    %208 = vmatpush1.msra.mxu0 0.0
    %209 = vmatprep.subr.mxu0 0.0
    %210 = vmatpush1.msra.mxu0 0.0
    %211 = vmatprep.subr.mxu0 0.0
    %212 = vmatpush1.msra.mxu0 0.0
    %213 = vmatprep.subr.mxu0 0.0
    %214 = vmatpush1.msra.mxu0 0.0
    %215 = vmatprep.subr.mxu0 0.0
    %216 = vmatpush1.msra.mxu0 0.0
    %217 = vmatprep.subr.mxu0 0.0
    %218 = vmatpush1.msra.mxu0 0.0
    %219 = vmatprep.subr.mxu0 0.0
    %220 = vmatpush1.msra.mxu0 0.0
    %221 = vmatprep.subr.mxu0 0.0
    %222 = vmatpush1.msra.mxu0 0.0
    %223 = vmatprep.subr.mxu0 0.0
    %224 = vmatpush1.msra.mxu0 0.0
    %225 = vmatprep.subr.mxu0 0.0
    %226 = vmatpush1.msra.mxu0 0.0
    %227 = vmatprep.subr.mxu0 0.0
    %228 = vmatpush1.msra.mxu0 0.0
    %229 = vmatprep.subr.mxu0 0.0
    %230 = vmatpush1.msra.mxu0 0.0
    %231 = vmatprep.subr.mxu0 0.0
    %232 = vmatpush1.msra.mxu0 0.0
    %233 = vmatprep.subr.mxu0 0.0
    %234 = vmatpush1.msra.mxu0 0.0
    %235 = vmatprep.subr.mxu0 0.0
    %236 = vmatpush1.msra.mxu0 0.0
    %237 = vmatprep.mubr.f32.mxu0 0.0
    %238 = vmatmul.mubr.f32.gmra.mrb[0].mxu0 %v101
    %v239 = vpop.f32.mrb[0].mxu0
    %v240 = vadd.f32 0.0, %v239
    %v241 = vpop.f32.mrb[0].mxu0
    %242 = vdwg.mxu0
    %v243 = vmul.f32 %v99, %v99
    %v244 = vsel %vm34, %v243, 0.0
    %245 = vadd.xlane.f32.xlu0 %v244
    %v246 = vpop.xlane.xlu0 %245
    %v247 = vmul.f32 %v170, %v99
    %v248 = vsel %vm34, %v247, 0.0
    %249 = vadd.xlane.f32.xlu0 %v248
    %v250 = vpop.xlane.xlu0 %249
    %v251 = vmul.f32 %v250, 2.0
    %v252 = vsub.f32 %v240, %v251
    %v253 = vrcp.pop %v31
    %v254 = vmul.f32 %v252, %v253
    %v255 = vadd.f32 %v254, %v246
    %vm256 = vcmask 7168
    %v257 = vsel %vm256, %v255, 0.0
    %258 = vadd.xlane.f32.xlu0 %v257
    %v259 = vpop.xlane.xlu0 %258
    %v260 = vrot.slane %v259, 4
    %v261 = vadd.f32 %v259, %v260
    %v262 = vrot.slane %v261, 2
    %v263 = vadd.f32 %v261, %v262
    %v264 = vrot.slane %v263, 1
    %v265 = vadd.f32 %v263, %v264
    %s266 = vtos %v265
    %s267 = scalar_lea.smem [#allocation4], 0
    %268 = sst [smem:[%s267]] %s266
    // Predicated region
    $region10: #{tpu_custom_call.1} parent=1 // pred_check
      _
    $region11: #{tpu_custom_call.1} parent=1 // pred_check_branch
      %270 = sbr.rel (0) target = $region13
    $region12: #{tpu_custom_call.1} parent=1 // pred_region
      %s272 = ssub.s32 16, 16
      %273 = vsyncadd [#allocation5], %s272
      %276 = dma.smem_to_hbm [#allocation4], 16, %s3, [#allocation5]
    $region13: #{tpu_custom_call.1} parent=1 // pred_fallthru
      _
    // Predicated region
    $region14: #{tpu_custom_call.1} parent=1 // pred_check
      _
    $region15: #{tpu_custom_call.1} parent=1 // pred_check_branch
      %278 = sbr.rel (0) target = $region17
    $region16: #{tpu_custom_call.1} parent=1 // pred_region
      %279 = dma.done [#allocation5], 16
    $region17: #{tpu_custom_call.1} parent=1 // pred_fallthru
      _
    %280 = sfence
    %281 = vsyncpa [#allocation5], 1

</llo_original>
